<compile_context>
chip_gen: v6e
topology: v6e:2x2x1
jax: 0.10.0
libtpu: 0.0.40
codegen_flags: <defaults>
</compile_context>

<pallas_src>
import jax
import jax.numpy as jnp
from jax.experimental import pallas as pl
from jax.experimental.pallas import tpu as pltpu

ALPHA = 0.05

# Widest lane-dense column count that divides the element count wins.
_LANE_CANDIDATES = (8192, 4096, 2048, 1024, 512, 256, 128)
# Below this, per-step overhead dominates: use one full-array block.
_SMALL_BYTES = 512 * 1024


def _lrelu_kernel(x_ref, o_ref):
    x = x_ref[...]
    # For 0 <= ALPHA <= 1 this is exactly torch.maximum(alpha*x, x).
    o_ref[...] = jnp.maximum(ALPHA * x, x).astype(o_ref.dtype)


def _sublane_granule(dtype) -> int:
    itemsize = jnp.dtype(dtype).itemsize
    if itemsize >= 4:
        return 8
    if itemsize == 2:
        return 16
    return 32


def _chip_tuning():
    """(block_bytes, vmem_limit_bytes_or_None, want_even_grid) per generation."""
    kind = ""
    try:
        kind = jax.devices()[0].device_kind.lower()
    except Exception:
        pass
    if "v7" in kind:
        # ~3.2 TB/s HBM: large tiles amortize the ~0.35us/step cost; 4x6 MiB
        # (double-buffered in+out) = 24 MiB, under the 32 MiB scoped limit and
        # the 64 MiB/TC physical VMEM. Two TCs share the parallel grid axis.
        return 6 * 1024 * 1024, 32 * 1024 * 1024, True
    if "v6" in kind or "trillium" in kind:
        # ~86% of HBM roofline at 4 MiB tiles; 16 MiB buffered < 32 MiB default.
        return 4 * 1024 * 1024, None, False
    # v5e and unknown/older chips: 2 MiB tiles (8 MiB buffered, well under the
    # 16 MiB default scoped VMEM); per-step overhead already <7% at 820 GB/s.
    return 2 * 1024 * 1024, None, False


def _cost(n_elems: int, itemsize: int) -> pl.CostEstimate:
    # 1 read + 1 write of n elements, one max + one mul per element, no EUP.
    return pl.CostEstimate(flops=n_elems, transcendentals=0,
                           bytes_accessed=2 * n_elems * itemsize)


def _run_whole(x: jax.Array, donate: bool) -> jax.Array:
    """Single full-array block (no grid): only for tiny inputs."""
    kwargs = {}
    if donate:
        kwargs["input_output_aliases"] = {0: 0}
    return pl.pallas_call(
        _lrelu_kernel,
        out_shape=jax.ShapeDtypeStruct(x.shape, x.dtype),
        cost_estimate=_cost(x.size, jnp.dtype(x.dtype).itemsize),
        **kwargs,
    )(x)


def _run_2d(x2d: jax.Array, donate: bool = False) -> jax.Array:
    """Tiled elementwise kernel over a lane-dense (rows, cols) slab."""
    rows, cols = x2d.shape
    dtype = x2d.dtype
    itemsize = jnp.dtype(dtype).itemsize
    total_bytes = rows * cols * itemsize

    if total_bytes <= _SMALL_BYTES:
        return _run_whole(x2d, donate)

    block_bytes, vmem_limit, even_grid = _chip_tuning()
    granule = _sublane_granule(dtype)
    block_rows = (block_bytes // (cols * itemsize)) // granule * granule
    block_rows = max(granule, block_rows)
    block_rows = min(block_rows, pl.cdiv(rows, granule) * granule)
    n_blocks = pl.cdiv(rows, block_rows)

    # v7x: two TensorCores split the "parallel" grid axis -- keep the block
    # count even so both cores stream equal HBM traffic.
    if even_grid and n_blocks > 1 and n_blocks % 2 == 1:
        block_rows = max(
            granule, pl.cdiv(pl.cdiv(rows, n_blocks + 1), granule) * granule)
        n_blocks = pl.cdiv(rows, block_rows)

    compiler_kwargs = dict(dimension_semantics=("parallel",))
    if vmem_limit is not None:
        compiler_kwargs["vmem_limit_bytes"] = vmem_limit
    kwargs = {}
    if donate:
        kwargs["input_output_aliases"] = {0: 0}

    return pl.pallas_call(
        _lrelu_kernel,
        out_shape=jax.ShapeDtypeStruct((rows, cols), dtype),
        grid_spec=pltpu.PrefetchScalarGridSpec(
            num_scalar_prefetch=0,
            grid=(n_blocks,),
            in_specs=[pl.BlockSpec((block_rows, cols), lambda i: (i, 0))],
            out_specs=pl.BlockSpec((block_rows, cols), lambda i: (i, 0)),
        ),
        compiler_params=pltpu.CompilerParams(**compiler_kwargs),
        cost_estimate=_cost(rows * cols, itemsize),
        **kwargs,
    )(x2d)


def _run_1d(x_flat: jax.Array, donate: bool = False) -> jax.Array:
    """Ragged fallback: tile the flat array directly; Pallas masks the tail."""
    n = x_flat.shape[0]
    dtype = x_flat.dtype
    itemsize = jnp.dtype(dtype).itemsize
    total_bytes = n * itemsize

    if total_bytes <= _SMALL_BYTES:
        return _run_whole(x_flat, donate)

    block_bytes, vmem_limit, even_grid = _chip_tuning()
    block_n = max(128, (block_bytes // itemsize) // 128 * 128)
    n_blocks = pl.cdiv(n, block_n)
    if even_grid and n_blocks > 1 and n_blocks % 2 == 1:
        block_n = max(128, pl.cdiv(pl.cdiv(n, n_blocks + 1), 128) * 128)
        n_blocks = pl.cdiv(n, block_n)

    compiler_kwargs = dict(dimension_semantics=("parallel",))
    if vmem_limit is not None:
        compiler_kwargs["vmem_limit_bytes"] = vmem_limit
    kwargs = {}
    if donate:
        kwargs["input_output_aliases"] = {0: 0}

    return pl.pallas_call(
        _lrelu_kernel,
        out_shape=jax.ShapeDtypeStruct((n,), dtype),
        grid_spec=pltpu.PrefetchScalarGridSpec(
            num_scalar_prefetch=0,
            grid=(n_blocks,),
            in_specs=[pl.BlockSpec((block_n,), lambda i: (i,))],
            out_specs=pl.BlockSpec((block_n,), lambda i: (i,)),
        ),
        compiler_params=pltpu.CompilerParams(**compiler_kwargs),
        cost_estimate=_cost(n, itemsize),
        **kwargs,
    )(x_flat)


def lrelu(x: jax.Array, donate: bool = False) -> jax.Array:
    """Elementwise maximum(alpha * x, x) for any tensor shape (NCHW etc.)."""
    if x.size == 0:
        return x
    orig_shape = x.shape
    n = x.size

    # Widest lane-dense column count that divides n (free reshape, no traffic).
    cols = None
    for c in _LANE_CANDIDATES:
        if n % c == 0:
            cols = c
            break

    if cols is not None:
        x2d = x.reshape(n // cols, cols)
        return _run_2d(x2d, donate).reshape(orig_shape)

    # Rare ragged case: no full-array pad/slice copies, tile the flat array.
    return _run_1d(x.reshape(-1), donate).reshape(orig_shape)


if __name__ == "__main__":
    key = jax.random.PRNGKey(0)
    x = jax.random.normal(key, (2, 4, 16, 16), dtype=jnp.float32)  # NCHW

    y = lrelu(x)
    jax.block_until_ready(y)

    # Reference check against plain JAX.
    y_ref = jnp.maximum(ALPHA * x, x)
    assert y.shape == x.shape and y.dtype == x.dtype
    assert jnp.allclose(y, y_ref, atol=1e-6, rtol=1e-6)

    print("KERNEL_OK")
</pallas_src>

<mosaic_0001>
module attributes {stable_mosaic.version = 11 : i64} {
  func.func @_lrelu_kernel(%arg0: memref<1x2048xf32, #tpu.memory_space<vmem>>, %arg1: memref<1x2048xf32, #tpu.memory_space<vmem>>) attributes {dimension_semantics = [], scalar_prefetch = 0 : i64, scratch_operands = 0 : i64, tpu.core_type = #tpu.core_type<tc>} {
    %c0 = arith.constant 0 : index
    %c0_0 = arith.constant 0 : index
    %0 = vector.load %arg0[%c0, %c0_0] : memref<1x2048xf32, #tpu.memory_space<vmem>>, vector<1x2048xf32>
    %cst = arith.constant 5.000000e-02 : f32
    %1 = vector.broadcast %cst : f32 to vector<1x2048xf32>
    %2 = arith.mulf %1, %0 : vector<1x2048xf32>
    %3 = arith.maximumf %2, %0 : vector<1x2048xf32>
    %c0_1 = arith.constant 0 : index
    %c0_2 = arith.constant 0 : index
    %4 = vector.load %arg1[%c0_1, %c0_2] : memref<1x2048xf32, #tpu.memory_space<vmem>>, vector<1x2048xf32>
    tpu.vector_store %arg1[%c0_1, %c0_2], %3 {strides = array<i32>} : memref<1x2048xf32, #tpu.memory_space<vmem>>, vector<1x2048xf32>,
    return
  }
}

</mosaic_0001>

<llo_original>
// kernel: tpu_custom_call.1
$region0: #{tpu_custom_call.1}
  #allocation0 [shape = 'u32[]', space=smem, size = 0x4, offset = 0x4, fixed_abs, tag = 'smem constant byte address 0x4 - core index']
  #allocation1 [shape = 'u32[144,128]{1,0:T(1,128)}', space=vmem, size = 0x12000, scoped, tag = 'internal scratch']
  %s0 = inlined_call_operand.hbm [shape: f32[1,2048], index: 0, kind: input, shape index: {}]
  %s1 = inlined_call_operand.hbm [shape: f32[1,2048], index: 1, kind: output, shape index: {}]
  %s2 = sld [smem:[#allocation0]]
  $region18: #{tpu_custom_call.1} parent=0
    _
  %s4 = ssub.s32 1, %s2
  %s5 = scalar_select 0, %s4, %s2
  $region1: #{tpu_custom_call.1} parent=0
    #allocation2 [shape = 'u8[8192]{0}', space=vmem, size = 0x2000, scoped, tag = 'input window, operand 0, single buffered']
    #allocation3 [shape = 's32[1]{0}', space=sflag, size = 0x4, scoped, tag = 'scoped memory for tpu_custom_call.1']
    #allocation4 [shape = 's32[1]{0}', space=sflag, size = 0x4, scoped, tag = 'scoped memory for tpu_custom_call.1']
    #allocation5 [shape = 'u8[8192]{0}', space=vmem, size = 0x2000, scoped, tag = 'output window, operand 0, single buffered']
    %6 = vsyncpa [#allocation3], 0
    %7 = vsyncpa [#allocation4], 0
    // Predicated region
    $region2: #{tpu_custom_call.1} parent=1 // pred_check
      _
    $region3: #{tpu_custom_call.1} parent=1 // pred_check_branch
      %9 = sbr.rel (0) target = $region5
    $region4: #{tpu_custom_call.1} parent=1 // pred_region
      %s11 = ssub.s32 256, 256
      %12 = vsyncadd [#allocation3], %s11
      %s14 = sshll.u32 [#allocation2], 4
      %s15 = int_to_ptr.vmem [resolvable:$true] %s14
      %17 = dma.hbm_to_vmem [thread:$0]  %s0, 256, %s15, [#allocation3]
    $region5: #{tpu_custom_call.1} parent=1 // pred_fallthru
      _
    // Predicated region
    $region6: #{tpu_custom_call.1} parent=1 // pred_check
      _
    $region7: #{tpu_custom_call.1} parent=1 // pred_check_branch
      %19 = sbr.rel (0) target = $region9
    $region8: #{tpu_custom_call.1} parent=1 // pred_region
      %20 = dma.done [#allocation3], 256
    $region9: #{tpu_custom_call.1} parent=1 // pred_fallthru
      _
    %v21 = vld [vmem:[#allocation2] sm:$0xff]
    %v22 = vld [vmem:[#allocation2 + $0x8] sm:$0xff]
    %v23 = vmul.f32 %v21, 0.05
    %v24 = vmul.f32 %v22, 0.05
    %v25 = vmax.f32 %v23, %v21
    %v26 = vmax.f32 %v24, %v22
    %27 = vst [vmem:[#allocation5] sm:$0xff] %v25
    %28 = vst [vmem:[#allocation5 + $0x8] sm:$0xff] %v26
    // Predicated region
    $region10: #{tpu_custom_call.1} parent=1 // pred_check
      _
    $region11: #{tpu_custom_call.1} parent=1 // pred_check_branch
      %30 = sbr.rel (0) target = $region13
    $region12: #{tpu_custom_call.1} parent=1 // pred_region
      %s32 = ssub.s32 256, 256
      %33 = vsyncadd [#allocation4], %s32
      %s35 = sshll.u32 [#allocation5], 4
      %s36 = int_to_ptr.vmem [resolvable:$true] %s35
      %38 = dma.vmem_to_hbm [thread:$0]  %s36, 256, %s1, [#allocation4]
    $region13: #{tpu_custom_call.1} parent=1 // pred_fallthru
      _
    // Predicated region
    $region14: #{tpu_custom_call.1} parent=1 // pred_check
      _
    $region15: #{tpu_custom_call.1} parent=1 // pred_check_branch
      %40 = sbr.rel (0) target = $region17
    $region16: #{tpu_custom_call.1} parent=1 // pred_region
      %41 = dma.done [#allocation4], 256
    $region17: #{tpu_custom_call.1} parent=1 // pred_fallthru
      _
    %42 = vsyncpa [#allocation3], 1
    %43 = vsyncpa [#allocation4], 1

</llo_original>
